<compile_context>
chip_gen: v5e
topology: v5e:2x2
jax: 0.10.0
libtpu: 0.0.40
codegen_flags: <defaults>
</compile_context>

<pallas_src>
import functools

import jax
import jax.numpy as jnp
from jax import lax
from jax.experimental import pallas as pl
from jax.experimental.pallas import tpu as pltpu

IN_CHANNELS = [256, 512, 1024]


# ----------------------------------------------------------------------------
# helpers
# ----------------------------------------------------------------------------
def _round_up(x, m):
    return (x + m - 1) // m * m


def _sigmoid(x):
    return 1.0 / (1.0 + jnp.exp(-x))


def _silu(x):
    return x * _sigmoid(x)


def _pick_row_tile(n, target=512):
    return min(target, _round_up(n, 8))


def _pick_band(h, w, target=8):
    """Output-row band: divides h; band*(w+2) a multiple of 8 if possible."""
    wp = w + 2
    for band in range(min(h, target), 0, -1):
        if h % band == 0 and (band * wp) % 8 == 0:
            return band
    return h  # single band: block equals the full array dim -> always legal


# ----------------------------------------------------------------------------
# Kernel 1: stem 1x1 conv (row-tiled matmul) + folded-BN shift + SiLU
# ----------------------------------------------------------------------------
def stem_kernel(x_ref, w_ref, b_ref, o_ref):
    y = jnp.dot(x_ref[...], w_ref[...], preferred_element_type=jnp.float32)
    y = _silu(y + b_ref[...])
    o_ref[...] = y.astype(o_ref.dtype)


def stem_conv1x1(x2d_bf16, w_bf16, shift_f32):
    n, cin = x2d_bf16.shape
    cout = w_bf16.shape[1]
    tm = _pick_row_tile(n)
    n_pad = _round_up(n, tm)
    if n_pad != n:
        x2d_bf16 = jnp.pad(x2d_bf16, ((0, n_pad - n), (0, 0)))
    out = pl.pallas_call(
        stem_kernel,
        out_shape=jax.ShapeDtypeStruct((n_pad, cout), jnp.bfloat16),
        grid=(n_pad // tm,),
        in_specs=[
            pl.BlockSpec((tm, cin), lambda i: (i, 0)),
            pl.BlockSpec((cin, cout), lambda i: (0, 0)),
            pl.BlockSpec((1, cout), lambda i: (0, 0)),
        ],
        out_specs=pl.BlockSpec((tm, cout), lambda i: (i, 0)),
        compiler_params=pltpu.CompilerParams(dimension_semantics=("parallel",)),
    )(x2d_bf16, w_bf16, shift_f32)
    return out[:n]


# ----------------------------------------------------------------------------
# Kernel 2: fused (cls branch 2x3x3) + (reg branch 2x3x3) + heads + decode
# ----------------------------------------------------------------------------
def fused_branch_head_kernel(xp_ref, wc1_ref, sc1_ref, wc2_ref, sc2_ref,
                             wr1_ref, sr1_ref, wr2_ref, sr2_ref,
                             whr_ref, whc_ref, bh_ref, o_ref,
                             xbuf, dma_sem, *, band, h, w, nc, stride):
    wp = w + 2
    feat = xbuf.shape[1]
    m1 = (band + 2) * wp          # conv1 output positions (flat, incl. edges)
    m2 = band * wp                # conv2 / head output positions
    n_in = (band + 4) * wp + 8    # halo rows (flat) incl. zero tail

    bi = pl.program_id(0)
    ri = pl.program_id(1)
    r0 = ri * band                # first output image row of this band

    # ---- fetch halo band (band+4 padded rows, flattened) from HBM ----------
    start = r0 * wp
    if (band * wp) % 8 == 0:
        start = pl.multiple_of(start, 8)
    cp = pltpu.make_async_copy(xp_ref.at[bi, pl.ds(start, n_in), :],
                               xbuf, dma_sem.at[0])
    cp.start()
    cp.wait()

    def conv3x3(src, w_ref, m_out):
        # src is flat (rows*wp, feat): tap (kh, kw) is a contiguous row slice.
        acc = jnp.dot(src[0:m_out, :], w_ref[0],
                      preferred_element_type=jnp.float32)
        for t in range(1, 9):
            kh, kw = divmod(t, 3)
            off = kh * wp + kw
            acc = acc + jnp.dot(src[off:off + m_out, :], w_ref[t],
                                preferred_element_type=jnp.float32)
        return acc

    def branch(w1_ref, s1_ref, w2_ref, s2_ref):
        y1 = _silu(conv3x3(xbuf, w1_ref, m1) + s1_ref[...])
        # Zero every position that is not a valid image pixel: those zeros
        # become the zero padding of the second conv.
        i1 = lax.broadcasted_iota(jnp.int32, (m1, 1), 0)
        row1 = r0 - 1 + i1 // wp
        ok = (i1 % wp < w) & (row1 >= 0) & (row1 < h)
        y1 = jnp.where(ok, y1, 0.0).astype(jnp.bfloat16)
        # Shift by one flat position (= +1 column in padded coords): prepending
        # one zero row turns y1 into conv2's zero-padded flat input; the tail
        # zeros cover the last (garbage) tap positions.
        ypad = jnp.concatenate(
            [jnp.zeros((1, feat), jnp.bfloat16), y1,
             jnp.zeros((8, feat), jnp.bfloat16)], axis=0)
        z = _silu(conv3x3(ypad, w2_ref, m2) + s2_ref[...])
        return z.astype(jnp.bfloat16)                      # (m2, feat)

    cls_feat = branch(wc1_ref, sc1_ref, wc2_ref, sc2_ref)
    reg_feat = branch(wr1_ref, sr1_ref, wr2_ref, sr2_ref)

    # ---- prediction heads (lane-dense, zero-padded weights) + decode -------
    raw = (jnp.dot(reg_feat, whr_ref[...], preferred_element_type=jnp.float32)
           + jnp.dot(cls_feat, whc_ref[...], preferred_element_type=jnp.float32)
           + bh_ref[...])                                  # (m2, OUTP) f32
    outp = raw.shape[1]

    idx = lax.broadcasted_iota(jnp.int32, (m2, 1), 0)
    col = idx % wp                                         # image column j
    row = r0 + idx // wp                                   # image row
    lane = lax.broadcasted_iota(jnp.int32, (m2, outp), 1)
    grid_term = jnp.where(lane == 0, col.astype(jnp.float32),
                          jnp.where(lane == 1, row.astype(jnp.float32), 0.0))
    dec = jnp.where(lane < 2, (raw + grid_term) * stride,
          jnp.where(lane < 4, jnp.exp(raw) * stride,
          jnp.where(lane < 5 + nc, _sigmoid(raw), 0.0)))
    dec = jnp.where(col < w, dec, 0.0)                     # padded-width cols
    o_ref[...] = dec.reshape(o_ref.shape).astype(o_ref.dtype)


def branch_head_level(stem_map_bf16, p, nc, stride, band):
    b, h, w, feat = stem_map_bf16.shape
    wp = w + 2
    nb = h // band
    outp = p["head_b"].shape[1]

    # Pad 2 rows top/bottom + 1 col left/right, flatten (rows, cols), add a
    # zero tail so every halo DMA stays in bounds.  (Only ~1.1x inflation.)
    xp = jnp.pad(stem_map_bf16, ((0, 0), (2, 2), (1, 1), (0, 0)))
    xp = xp.reshape(b, (h + 4) * wp, feat)
    xp = jnp.pad(xp, ((0, 0), (0, 8), (0, 0)))

    kernel = functools.partial(fused_branch_head_kernel,
                               band=band, h=h, w=w, nc=nc, stride=float(stride))
    out = pl.pallas_call(
        kernel,
        out_shape=jax.ShapeDtypeStruct((b, h * wp, outp), jnp.float32),
        grid=(b, nb),
        in_specs=[
            pl.BlockSpec(memory_space=pl.ANY),
            pl.BlockSpec((9, feat, feat), lambda bi, ri: (0, 0, 0)),
            pl.BlockSpec((1, feat), lambda bi, ri: (0, 0)),
            pl.BlockSpec((9, feat, feat), lambda bi, ri: (0, 0, 0)),
            pl.BlockSpec((1, feat), lambda bi, ri: (0, 0)),
            pl.BlockSpec((9, feat, feat), lambda bi, ri: (0, 0, 0)),
            pl.BlockSpec((1, feat), lambda bi, ri: (0, 0)),
            pl.BlockSpec((9, feat, feat), lambda bi, ri: (0, 0, 0)),
            pl.BlockSpec((1, feat), lambda bi, ri: (0, 0)),
            pl.BlockSpec((feat, outp), lambda bi, ri: (0, 0)),
            pl.BlockSpec((feat, outp), lambda bi, ri: (0, 0)),
            pl.BlockSpec((1, outp), lambda bi, ri: (0, 0)),
        ],
        out_specs=pl.BlockSpec((1, band * wp, outp), lambda bi, ri: (bi, ri, 0)),
        scratch_shapes=[
            pltpu.VMEM(((band + 4) * wp + 8, feat), jnp.bfloat16),
            pltpu.SemaphoreType.DMA((1,)),
        ],
        compiler_params=pltpu.CompilerParams(
            dimension_semantics=("parallel", "parallel")),
    )(xp,
      p["cls_w1"], p["cls_s1"], p["cls_w2"], p["cls_s2"],
      p["reg_w1"], p["reg_s1"], p["reg_w2"], p["reg_s2"],
      p["head_reg_w"], p["head_cls_w"], p["head_b"])

    # Strip the padded-width columns and the lane padding in the wrapper.
    out = out.reshape(b, h, wp, outp)[:, :, :w, :5 + nc]
    return out.reshape(b, h * w, 5 + nc)


# ----------------------------------------------------------------------------
# Parameter construction (deterministic, synthetic; BN scale folded into w)
# ----------------------------------------------------------------------------
class _Keys:
    def __init__(self, seed):
        self._base = jax.random.PRNGKey(seed)
        self._i = 0

    def next(self, n=1):
        ks = [jax.random.fold_in(self._base, self._i + j) for j in range(n)]
        self._i += n
        return ks if n > 1 else ks[0]


def _bn_scale_shift(keys, c):
    gamma = 1.0 + 0.1 * jax.random.normal(keys[0], (c,), jnp.float32)
    beta = 0.1 * jax.random.normal(keys[1], (c,), jnp.float32)
    mean = 0.1 * jax.random.normal(keys[2], (c,), jnp.float32)
    var = 1.0 + 0.1 * jnp.abs(jax.random.normal(keys[3], (c,), jnp.float32))
    scale = gamma / jnp.sqrt(var + 1e-5)
    shift = beta - mean * scale
    return scale, shift


def make_params(num_classes, width, seed=0):
    kg = _Keys(seed)
    feat = int(256 * width)
    in_channels = [int(c * width) for c in IN_CHANNELS]
    outp = max(128, _round_up(5 + num_classes, 128))
    params = []
    for in_c in in_channels:
        p = {}
        # stem: BaseConv(in_c -> feat, 1x1), BN scale folded into the weight.
        w = 0.1 * jax.random.normal(kg.next(), (in_c, feat), jnp.float32)
        sc, sh = _bn_scale_shift(kg.next(4), feat)
        p["stem_w"] = (w * sc[None, :]).astype(jnp.bfloat16)
        p["stem_s"] = sh.reshape(1, feat)
        # cls / reg branches: 2x BaseConv(feat -> feat, 3x3) each.
        for name in ("cls", "reg"):
            for i in (1, 2):
                w3 = 0.05 * jax.random.normal(kg.next(), (3, 3, feat, feat),
                                              jnp.float32)
                sc, sh = _bn_scale_shift(kg.next(4), feat)
                w3 = w3 * sc[None, None, None, :]
                p[f"{name}_w{i}"] = w3.reshape(9, feat, feat).astype(jnp.bfloat16)
                p[f"{name}_s{i}"] = sh.reshape(1, feat)
        # 1x1 prediction heads (with bias), packed lane-dense into OUTP cols:
        #   reg_feat @ head_reg_w -> cols 0..3 (reg) + col 4 (obj)
        #   cls_feat @ head_cls_w -> cols 5..5+nc (cls)
        reg_w = 0.1 * jax.random.normal(kg.next(), (feat, 4), jnp.float32)
        reg_b = 0.1 * jax.random.normal(kg.next(), (4,), jnp.float32)
        obj_w = 0.1 * jax.random.normal(kg.next(), (feat, 1), jnp.float32)
        obj_b = 0.1 * jax.random.normal(kg.next(), (1,), jnp.float32)
        cls_w = 0.1 * jax.random.normal(kg.next(), (feat, num_classes),
                                        jnp.float32)
        cls_b = 0.1 * jax.random.normal(kg.next(), (num_classes,), jnp.float32)
        hr = jnp.zeros((feat, outp), jnp.float32)
        hr = hr.at[:, 0:4].set(reg_w).at[:, 4:5].set(obj_w)
        hc = jnp.zeros((feat, outp), jnp.float32)
        hc = hc.at[:, 5:5 + num_classes].set(cls_w)
        hb = jnp.zeros((1, outp), jnp.float32)
        hb = hb.at[0, 0:4].set(reg_b).at[0, 4].set(obj_b[0])
        hb = hb.at[0, 5:5 + num_classes].set(cls_b)
        p["head_reg_w"] = hr.astype(jnp.bfloat16)
        p["head_cls_w"] = hc.astype(jnp.bfloat16)
        p["head_b"] = hb
        params.append(p)
    return params


# ----------------------------------------------------------------------------
# Full forward (YOLOXHead.forward + decode_outputs fused into the head kernel)
# ----------------------------------------------------------------------------
def yolox_head_forward(xin_nchw, params, num_classes, strides):
    level_outs = []
    for k, x in enumerate(xin_nchw):
        p = params[k]
        b, _, h, w = x.shape
        x_nhwc = jnp.transpose(x, (0, 2, 3, 1)).astype(jnp.bfloat16)

        feat = p["stem_w"].shape[1]
        stem2d = stem_conv1x1(x_nhwc.reshape(b * h * w, -1),
                              p["stem_w"], p["stem_s"])
        stem_map = stem2d.reshape(b, h, w, feat)

        band = _pick_band(h, w, target=8)
        level_outs.append(
            branch_head_level(stem_map, p, num_classes, strides[k], band))

    return jnp.concatenate(level_outs, axis=1)   # (B, D, 5+nc), decoded


if __name__ == "__main__":
    num_classes = 3          # small synthetic class count (80 for real COCO)
    width = 0.125            # feat = 32, in_channels = [32, 64, 128]
    strides = [8, 16, 32]
    batch = 2
    img = 64                 # feature maps: 8x8, 4x4, 2x2

    in_channels = [int(c * width) for c in IN_CHANNELS]
    key = jax.random.PRNGKey(0)
    keys = jax.random.split(key, len(strides))
    xin = [jax.random.normal(keys[i],
                             (batch, in_channels[i], img // s, img // s),
                             jnp.float32)
           for i, s in enumerate(strides)]

    params = make_params(num_classes, width, seed=0)
    out = yolox_head_forward(xin, params, num_classes, strides)
    out = jax.block_until_ready(out)

    n_det = sum((img // s) ** 2 for s in strides)
    assert out.shape == (batch, n_det, 5 + num_classes), out.shape
    assert bool(jnp.all(jnp.isfinite(out)))
    print("KERNEL_OK")
</pallas_src>

<mosaic_0001>
module attributes {stable_mosaic.version = 11 : i64} {
  func.func @stem_kernel(%arg0: i32, %arg1: memref<128x32xbf16, #tpu.memory_space<vmem>>, %arg2: memref<32x32xbf16, #tpu.memory_space<vmem>>, %arg3: memref<1x32xf32, #tpu.memory_space<vmem>>, %arg4: memref<128x32xbf16, #tpu.memory_space<vmem>>) attributes {dimension_semantics = [#tpu.dimension_semantics<parallel>], iteration_bounds = array<i64: 1>, scalar_prefetch = 0 : i64, scratch_operands = 0 : i64, tpu.core_type = #tpu.core_type<tc>, window_params = [{transform_indices = @transform_0, window_bounds = array<i64: 128, 32>}, {pipeline_mode = #tpu.pipeline_mode<synchronous>, transform_indices = @transform_1, window_bounds = array<i64: 32, 32>}, {pipeline_mode = #tpu.pipeline_mode<synchronous>, transform_indices = @transform_2, window_bounds = array<i64: 1, 32>}, {transform_indices = @transform_3, window_bounds = array<i64: 128, 32>}]} {
    %c0 = arith.constant 0 : index
    %c0_0 = arith.constant 0 : index
    %0 = vector.load %arg1[%c0, %c0_0] : memref<128x32xbf16, #tpu.memory_space<vmem>>, vector<128x32xbf16>
    %c0_1 = arith.constant 0 : index
    %c0_2 = arith.constant 0 : index
    %1 = vector.load %arg2[%c0_1, %c0_2] : memref<32x32xbf16, #tpu.memory_space<vmem>>, vector<32x32xbf16>
    %cst = arith.constant dense<0.000000e+00> : vector<128x32xf32>
    %2 = tpu.matmul %0, %1, %cst {dimension_numbers = #tpu.dot_dimension_numbers<[1], [0], [0], [1], [0, 0, 1, 1], [], []>} : vector<128x32xbf16>, vector<32x32xbf16>, vector<128x32xf32> -> vector<128x32xf32>
    %c0_3 = arith.constant 0 : index
    %c0_4 = arith.constant 0 : index
    %3 = vector.load %arg3[%c0_3, %c0_4] : memref<1x32xf32, #tpu.memory_space<vmem>>, vector<1x32xf32>
    %4 = vector.broadcast %3 : vector<1x32xf32> to vector<128x32xf32>
    %5 = arith.addf %2, %4 : vector<128x32xf32>
    %cst_5 = arith.constant 0.000000e+00 : f32
    %6 = vector.broadcast %cst_5 : f32 to vector<128x32xf32>
    %7 = arith.subf %6, %5 : vector<128x32xf32>
    %8 = math.exp %7 : vector<128x32xf32>
    %cst_6 = arith.constant 1.000000e+00 : f32
    %9 = vector.broadcast %cst_6 : f32 to vector<128x32xf32>
    %10 = arith.addf %9, %8 : vector<128x32xf32>
    %cst_7 = arith.constant 1.000000e+00 : f32
    %11 = vector.broadcast %cst_7 : f32 to vector<128x32xf32>
    %12 = arith.divf %11, %10 : vector<128x32xf32>
    %13 = arith.mulf %5, %12 : vector<128x32xf32>
    %14 = arith.truncf %13 : vector<128x32xf32> to vector<128x32xbf16>
    %c0_8 = arith.constant 0 : index
    %c0_9 = arith.constant 0 : index
    %15 = vector.load %arg4[%c0_8, %c0_9] : memref<128x32xbf16, #tpu.memory_space<vmem>>, vector<128x32xbf16>
    tpu.vector_store %arg4[%c0_8, %c0_9], %14 {strides = array<i32>} : memref<128x32xbf16, #tpu.memory_space<vmem>>, vector<128x32xbf16>,
    return
  }
  func.func @transform_0(%arg0: i32) -> (i32, i32) {
    %c0_i32 = arith.constant 0 : i32
    %c0_i32_0 = arith.constant 0 : i32
    return %arg0, %c0_i32 : i32, i32
  }
  func.func @transform_1(%arg0: i32) -> (i32, i32) {
    %c0_i32 = arith.constant 0 : i32
    %c0_i32_0 = arith.constant 0 : i32
    %c0_i32_1 = arith.constant 0 : i32
    return %c0_i32, %c0_i32_0 : i32, i32
  }
  func.func @transform_2(%arg0: i32) -> (i32, i32) {
    %c0_i32 = arith.constant 0 : i32
    %c0_i32_0 = arith.constant 0 : i32
    %c0_i32_1 = arith.constant 0 : i32
    return %c0_i32, %c0_i32_0 : i32, i32
  }
  func.func @transform_3(%arg0: i32) -> (i32, i32) {
    %c0_i32 = arith.constant 0 : i32
    %c0_i32_0 = arith.constant 0 : i32
    return %arg0, %c0_i32 : i32, i32
  }
}

</mosaic_0001>

<llo_original>
// kernel: tpu_custom_call.1
$region0: #{tpu_custom_call.1}
  #allocation0 [shape = 'u32[]', space=smem, size = 0x4, offset = 0x4, fixed_abs, tag = 'smem constant byte address 0x4 - core index']
  #allocation1 [shape = 'u32[72,128]{1,0:T(1,128)}', space=vmem, size = 0x9000, scoped, tag = 'internal scratch']
  %s0 = inlined_call_operand.vmem [shape: bf16[128,32], index: 0, kind: input, shape index: {}]
  %s1 = inlined_call_operand.vmem [shape: bf16[32,32], index: 1, kind: input, shape index: {}]
  %s2 = inlined_call_operand.vmem [shape: f32[1,32], index: 2, kind: input, shape index: {}]
  %s3 = inlined_call_operand.vmem [shape: bf16[128,32], index: 3, kind: output, shape index: {}]
  %s4 = sld [smem:[#allocation0]]
  $region22: #{tpu_custom_call.1} parent=0
    _
  %s6 = ssub.s32 1, %s4
  %s7 = scalar_select 0, %s6, %s4
  // Predicated region
  $region2: #{tpu_custom_call.1} parent=0 // pred_check
    _
  $region3: #{tpu_custom_call.1} parent=0 // pred_check_branch
    %9 = sbr.rel (0) target = $region5
  $region4: #{tpu_custom_call.1} parent=0 // pred_region
    _
  $region5: #{tpu_custom_call.1} parent=0 // pred_fallthru
    _
  // Predicated region
  $region6: #{tpu_custom_call.1} parent=0 // pred_check
    _
  $region7: #{tpu_custom_call.1} parent=0 // pred_check_branch
    %11 = sbr.rel (0) target = $region9
  $region8: #{tpu_custom_call.1} parent=0 // pred_region
    _
  $region9: #{tpu_custom_call.1} parent=0 // pred_fallthru
    _
  // Predicated region
  $region10: #{tpu_custom_call.1} parent=0 // pred_check
    _
  $region11: #{tpu_custom_call.1} parent=0 // pred_check_branch
    %13 = sbr.rel (0) target = $region13
  $region12: #{tpu_custom_call.1} parent=0 // pred_region
    _
  $region13: #{tpu_custom_call.1} parent=0 // pred_fallthru
    _
  %v15 = vld [vmem:[%s0] sm:$0xf]
  %v16 = vld [vmem:[%s0 + $0x4] sm:$0xf]
  %v17 = vld [vmem:[%s0 + $0x8] sm:$0xf]
  %v18 = vld [vmem:[%s0 + $0xc] sm:$0xf]
  %v19 = vld [vmem:[%s0 + $0x10] sm:$0xf]
  %v20 = vld [vmem:[%s0 + $0x14] sm:$0xf]
  %v21 = vld [vmem:[%s0 + $0x18] sm:$0xf]
  %v22 = vld [vmem:[%s0 + $0x1c] sm:$0xf]
  %v23 = vld [vmem:[%s0 + $0x20] sm:$0xf]
  %v24 = vld [vmem:[%s0 + $0x24] sm:$0xf]
  %v25 = vld [vmem:[%s0 + $0x28] sm:$0xf]
  %v26 = vld [vmem:[%s0 + $0x2c] sm:$0xf]
  %v27 = vld [vmem:[%s0 + $0x30] sm:$0xf]
  %v28 = vld [vmem:[%s0 + $0x34] sm:$0xf]
  %v29 = vld [vmem:[%s0 + $0x38] sm:$0xf]
  %v30 = vld [vmem:[%s0 + $0x3c] sm:$0xf]
  %v31 = vld [vmem:[%s1] sm:$0xf]
  %v32 = vld [vmem:[%s1 + $0x4] sm:$0xf]
  %v33 = vld [vmem:[%s1 + $0x8] sm:$0xf]
  %v34 = vld [vmem:[%s1 + $0xc] sm:$0xf]
  %v35 = vld [vmem:[%s2] sm:$0x1]
  %v37 = vperm.slane %v35, 0
  %v55 = vunpack.c.l.b16 %v15
  %v56 = vunpack.c.l.b16 %v16
  %v57 = vunpack.c.l.b16 %v17
  %v58 = vunpack.c.l.b16 %v18
  %v59 = vunpack.c.l.b16 %v19
  %v60 = vunpack.c.l.b16 %v20
  %v61 = vunpack.c.l.b16 %v21
  %v62 = vunpack.c.l.b16 %v22
  %v63 = vunpack.c.l.b16 %v23
  %v64 = vunpack.c.l.b16 %v24
  %v65 = vunpack.c.l.b16 %v25
  %v66 = vunpack.c.l.b16 %v26
  %v67 = vunpack.c.l.b16 %v27
  %v68 = vunpack.c.l.b16 %v28
  %v69 = vunpack.c.l.b16 %v29
  %v70 = vunpack.c.l.b16 %v30
  %v71 = vpack.c.b16 %v56, %v55
  %v72 = vpack.c.b16 %v58, %v57
  %v73 = vpack.c.b16 %v60, %v59
  %v74 = vpack.c.b16 %v62, %v61
  %v75 = vpack.c.b16 %v64, %v63
  %v76 = vpack.c.b16 %v66, %v65
  %v77 = vpack.c.b16 %v68, %v67
  %v78 = vpack.c.b16 %v70, %v69
  %v83 = vunpack.c.l.b16 %v31
  %v84 = vunpack.c.l.b16 %v32
  %v85 = vunpack.c.l.b16 %v33
  %v86 = vunpack.c.l.b16 %v34
  %v87 = vpack.c.b16 %v84, %v83
  %v88 = vpack.c.b16 %v86, %v85
  %vm91 = vcmask 261120
  %v93 = vsel %vm91, %v71, 0
  %v96 = vsel %vm91, %v72, 0
  %v99 = vsel %vm91, %v73, 0
  %v102 = vsel %vm91, %v74, 0
  %v105 = vsel %vm91, %v75, 0
  %v108 = vsel %vm91, %v76, 0
  %v111 = vsel %vm91, %v77, 0
  %v114 = vsel %vm91, %v78, 0
  %116 = vmatpush.bf16.msra.mxu0 0
  %117 = vmatpush.bf16.msra.mxu0 0
  %118 = vmatpush.bf16.msra.mxu0 0
  %119 = vmatpush.bf16.msra.mxu0 0
  %120 = vmatpush.bf16.msra.mxu0 0
  %121 = vmatpush.bf16.msra.mxu0 0
  %122 = vmatpush.bf16.msra.mxu0 %v88
  %123 = vmatpush.bf16.msra.mxu0 %v87
  %124 = vmatmul.bf16.gmra.mxu0 %v93
  %v125 = vpop.f32.mrf.mxu0
  %v126 = vadd.f32 %v37, %v125
  %v127 = vpop.f32.mrf.mxu0
  %v128 = vadd.f32 %v37, %v127
  %129 = vmatmul.bf16.gmra.mxu0 %v96
  %v130 = vpop.f32.mrf.mxu0
  %v131 = vadd.f32 %v37, %v130
  %v132 = vpop.f32.mrf.mxu0
  %v133 = vadd.f32 %v37, %v132
  %134 = vmatmul.bf16.gmra.mxu0 %v99
  %v135 = vpop.f32.mrf.mxu0
  %v136 = vadd.f32 %v37, %v135
  %v137 = vpop.f32.mrf.mxu0
  %v138 = vadd.f32 %v37, %v137
  %139 = vmatmul.bf16.gmra.mxu0 %v102
  %v140 = vpop.f32.mrf.mxu0
  %v141 = vadd.f32 %v37, %v140
  %v142 = vpop.f32.mrf.mxu0
  %v143 = vadd.f32 %v37, %v142
  %144 = vmatmul.bf16.gmra.mxu0 %v105
  %v145 = vpop.f32.mrf.mxu0
  %v146 = vadd.f32 %v37, %v145
  %v147 = vpop.f32.mrf.mxu0
  %v148 = vadd.f32 %v37, %v147
  %149 = vmatmul.bf16.gmra.mxu0 %v108
  %v150 = vpop.f32.mrf.mxu0
  %v151 = vadd.f32 %v37, %v150
  %v152 = vpop.f32.mrf.mxu0
  %v153 = vadd.f32 %v37, %v152
  %154 = vmatmul.bf16.gmra.mxu0 %v111
  %v155 = vpop.f32.mrf.mxu0
  %v156 = vadd.f32 %v37, %v155
  %v157 = vpop.f32.mrf.mxu0
  %v158 = vadd.f32 %v37, %v157
  %159 = vmatmul.bf16.gmra.mxu0 %v114
  %v160 = vpop.f32.mrf.mxu0
  %v161 = vadd.f32 %v37, %v160
  %v162 = vpop.f32.mrf.mxu0
  %v163 = vadd.f32 %v37, %v162
  %164 = vdwg.mxu0
  %v165 = vsub.f32 0.0, %v126
  %v166 = vsub.f32 0.0, %v128
  %v167 = vsub.f32 0.0, %v131
  %v168 = vsub.f32 0.0, %v133
  %v169 = vsub.f32 0.0, %v136
  %v170 = vsub.f32 0.0, %v138
  %v171 = vsub.f32 0.0, %v141
  %v172 = vsub.f32 0.0, %v143
  %v173 = vsub.f32 0.0, %v146
  %v174 = vsub.f32 0.0, %v148
  %v175 = vsub.f32 0.0, %v151
  %v176 = vsub.f32 0.0, %v153
  %v177 = vsub.f32 0.0, %v156
  %v178 = vsub.f32 0.0, %v158
  %v179 = vsub.f32 0.0, %v161
  %v180 = vsub.f32 0.0, %v163
  %v181 = vmul.f32 %v165, 1.442695
  %v182 = vpow.pop %v181
  %v183 = vmul.f32 %v166, 1.442695
  %v184 = vpow.pop %v183
  %v185 = vmul.f32 %v167, 1.442695
  %v186 = vpow.pop %v185
  %v187 = vmul.f32 %v168, 1.442695
  %v188 = vpow.pop %v187
  %v189 = vmul.f32 %v169, 1.442695
  %v190 = vpow.pop %v189
  %v191 = vmul.f32 %v170, 1.442695
  %v192 = vpow.pop %v191
  %v193 = vmul.f32 %v171, 1.442695
  %v194 = vpow.pop %v193
  %v195 = vmul.f32 %v172, 1.442695
  %v196 = vpow.pop %v195
  %v197 = vmul.f32 %v173, 1.442695
  %v198 = vpow.pop %v197
  %v199 = vmul.f32 %v174, 1.442695
  %v200 = vpow.pop %v199
  %v201 = vmul.f32 %v175, 1.442695
  %v202 = vpow.pop %v201
  %v203 = vmul.f32 %v176, 1.442695
  %v204 = vpow.pop %v203
  %v205 = vmul.f32 %v177, 1.442695
  %v206 = vpow.pop %v205
  %v207 = vmul.f32 %v178, 1.442695
  %v208 = vpow.pop %v207
  %v209 = vmul.f32 %v179, 1.442695
  %v210 = vpow.pop %v209
  %v211 = vmul.f32 %v180, 1.442695
  %v212 = vpow.pop %v211
  %v213 = vadd.f32 %v182, 1.0
  %v214 = vadd.f32 %v184, 1.0
  %v215 = vadd.f32 %v186, 1.0
  %v216 = vadd.f32 %v188, 1.0
  %v217 = vadd.f32 %v190, 1.0
  %v218 = vadd.f32 %v192, 1.0
  %v219 = vadd.f32 %v194, 1.0
  %v220 = vadd.f32 %v196, 1.0
  %v221 = vadd.f32 %v198, 1.0
  %v222 = vadd.f32 %v200, 1.0
  %v223 = vadd.f32 %v202, 1.0
  %v224 = vadd.f32 %v204, 1.0
  %v225 = vadd.f32 %v206, 1.0
  %v226 = vadd.f32 %v208, 1.0
  %v227 = vadd.f32 %v210, 1.0
  %v228 = vadd.f32 %v212, 1.0
  %v229 = vrcp.pop %v213
  %v230 = vmul.f32 %v213, %v229
  %v231 = vsub.f32 1.0, %v230
  %v232 = vmul.f32 %v229, %v231
  %v233 = vadd.f32 %v229, %v232
  %vm234 = vweird.f32 %v213
  %vm235 = vweird.f32 %v229
  %vm236 = vmor %vm234, %vm235
  %v237 = vsel %vm236, %v229, %v233
  %v238 = vand.u32 2147483647, %v213
  %vm239 = vcmp.eq.f32.partialorder %v238, 8.507059e+37
  %v240 = vand.u32 %v213, 2147483648
  %v241 = vor.u32 1.1754944e-38, %v240
  %v242 = vsel %vm239, %v241, %v237
  %v243 = vmul.f32 1.0, %v242
  %v244 = vrcp.pop %v214
  %v245 = vmul.f32 %v214, %v244
  %v246 = vsub.f32 1.0, %v245
  %v247 = vmul.f32 %v244, %v246
  %v248 = vadd.f32 %v244, %v247
  %vm249 = vweird.f32 %v214
  %vm250 = vweird.f32 %v244
  %vm251 = vmor %vm249, %vm250
  %v252 = vsel %vm251, %v244, %v248
  %v253 = vand.u32 2147483647, %v214
  %vm254 = vcmp.eq.f32.partialorder %v253, 8.507059e+37
  %v255 = vand.u32 %v214, 2147483648
  %v256 = vor.u32 1.1754944e-38, %v255
  %v257 = vsel %vm254, %v256, %v252
  %v258 = vmul.f32 1.0, %v257
  %v259 = vrcp.pop %v215
  %v260 = vmul.f32 %v215, %v259
  %v261 = vsub.f32 1.0, %v260
  %v262 = vmul.f32 %v259, %v261
  %v263 = vadd.f32 %v259, %v262
  %vm264 = vweird.f32 %v215
  %vm265 = vweird.f32 %v259
  %vm266 = vmor %vm264, %vm265
  %v267 = vsel %vm266, %v259, %v263
  %v268 = vand.u32 2147483647, %v215
  %vm269 = vcmp.eq.f32.partialorder %v268, 8.507059e+37
  %v270 = vand.u32 %v215, 2147483648
  %v271 = vor.u32 1.1754944e-38, %v270
  %v272 = vsel %vm269, %v271, %v267
  %v273 = vmul.f32 1.0, %v272
  %v274 = vrcp.pop %v216
  %v275 = vmul.f32 %v216, %v274
  %v276 = vsub.f32 1.0, %v275
  %v277 = vmul.f32 %v274, %v276
  %v278 = vadd.f32 %v274, %v277
  %vm279 = vweird.f32 %v216
  %vm280 = vweird.f32 %v274
  %vm281 = vmor %vm279, %vm280
  %v282 = vsel %vm281, %v274, %v278
  %v283 = vand.u32 2147483647, %v216
  %vm284 = vcmp.eq.f32.partialorder %v283, 8.507059e+37
  %v285 = vand.u32 %v216, 2147483648
  %v286 = vor.u32 1.1754944e-38, %v285
  %v287 = vsel %vm284, %v286, %v282
  %v288 = vmul.f32 1.0, %v287
  %v289 = vrcp.pop %v217
  %v290 = vmul.f32 %v217, %v289
  %v291 = vsub.f32 1.0, %v290
  %v292 = vmul.f32 %v289, %v291
  %v293 = vadd.f32 %v289, %v292
  %vm294 = vweird.f32 %v217
  %vm295 = vweird.f32 %v289
  %vm296 = vmor %vm294, %vm295
  %v297 = vsel %vm296, %v289, %v293
  %v298 = vand.u32 2147483647, %v217
  %vm299 = vcmp.eq.f32.partialorder %v298, 8.507059e+37
  %v300 = vand.u32 %v217, 2147483648
  %v301 = vor.u32 1.1754944e-38, %v300
  %v302 = vsel %vm299, %v301, %v297
  %v303 = vmul.f32 1.0, %v302
  %v304 = vrcp.pop %v218
  %v305 = vmul.f32 %v218, %v304
  %v306 = vsub.f32 1.0, %v305
  %v307 = vmul.f32 %v304, %v306
  %v308 = vadd.f32 %v304, %v307
  %vm309 = vweird.f32 %v218
  %vm310 = vweird.f32 %v304
  %vm311 = vmor %vm309, %vm310
  %v312 = vsel %vm311, %v304, %v308
  %v313 = vand.u32 2147483647, %v218
  %vm314 = vcmp.eq.f32.partialorder %v313, 8.507059e+37
  %v315 = vand.u32 %v218, 2147483648
  %v316 = vor.u32 1.1754944e-38, %v315
  %v317 = vsel %vm314, %v316, %v312
  %v318 = vmul.f32 1.0, %v317
  %v319 = vrcp.pop %v219
  %v320 = vmul.f32 %v219, %v319
  %v321 = vsub.f32 1.0, %v320
  %v322 = vmul.f32 %v319, %v321
  %v323 = vadd.f32 %v319, %v322
  %vm324 = vweird.f32 %v219
  %vm325 = vweird.f32 %v319
  %vm326 = vmor %vm324, %vm325
  %v327 = vsel %vm326, %v319, %v323
  %v328 = vand.u32 2147483647, %v219
  %vm329 = vcmp.eq.f32.partialorder %v328, 8.507059e+37
  %v330 = vand.u32 %v219, 2147483648
  %v331 = vor.u32 1.1754944e-38, %v330
  %v332 = vsel %vm329, %v331, %v327
  %v333 = vmul.f32 1.0, %v332
  %v334 = vrcp.pop %v220
  %v335 = vmul.f32 %v220, %v334
  %v336 = vsub.f32 1.0, %v335
  %v337 = vmul.f32 %v334, %v336
  %v338 = vadd.f32 %v334, %v337
  %vm339 = vweird.f32 %v220
  %vm340 = vweird.f32 %v334
  %vm341 = vmor %vm339, %vm340
  %v342 = vsel %vm341, %v334, %v338
  %v343 = vand.u32 2147483647, %v220
  %vm344 = vcmp.eq.f32.partialorder %v343, 8.507059e+37
  %v345 = vand.u32 %v220, 2147483648
  %v346 = vor.u32 1.1754944e-38, %v345
  %v347 = vsel %vm344, %v346, %v342
  %v348 = vmul.f32 1.0, %v347
  %v349 = vrcp.pop %v221
  %v350 = vmul.f32 %v221, %v349
  %v351 = vsub.f32 1.0, %v350
  %v352 = vmul.f32 %v349, %v351
  %v353 = vadd.f32 %v349, %v352
  %vm354 = vweird.f32 %v221
  %vm355 = vweird.f32 %v349
  %vm356 = vmor %vm354, %vm355
  %v357 = vsel %vm356, %v349, %v353
  %v358 = vand.u32 2147483647, %v221
  %vm359 = vcmp.eq.f32.partialorder %v358, 8.507059e+37
  %v360 = vand.u32 %v221, 2147483648
  %v361 = vor.u32 1.1754944e-38, %v360
  %v362 = vsel %vm359, %v361, %v357
  %v363 = vmul.f32 1.0, %v362
  %v364 = vrcp.pop %v222
  %v365 = vmul.f32 %v222, %v364
  %v366 = vsub.f32 1.0, %v365
  %v367 = vmul.f32 %v364, %v366
  %v368 = vadd.f32 %v364, %v367
  %vm369 = vweird.f32 %v222
  %vm370 = vweird.f32 %v364
  %vm371 = vmor %vm369, %vm370
  %v372 = vsel %vm371, %v364, %v368
  %v373 = vand.u32 2147483647, %v222
  %vm374 = vcmp.eq.f32.partialorder %v373, 8.507059e+37
  %v375 = vand.u32 %v222, 2147483648
  %v376 = vor.u32 1.1754944e-38, %v375
  %v377 = vsel %vm374, %v376, %v372
  %v378 = vmul.f32 1.0, %v377
  %v379 = vrcp.pop %v223
  %v380 = vmul.f32 %v223, %v379
  %v381 = vsub.f32 1.0, %v380
  %v382 = vmul.f32 %v379, %v381
  %v383 = vadd.f32 %v379, %v382
  %vm384 = vweird.f32 %v223
  %vm385 = vweird.f32 %v379
  %vm386 = vmor %vm384, %vm385
  %v387 = vsel %vm386, %v379, %v383
  %v388 = vand.u32 2147483647, %v223
  %vm389 = vcmp.eq.f32.partialorder %v388, 8.507059e+37
  %v390 = vand.u32 %v223, 2147483648
  %v391 = vor.u32 1.1754944e-38, %v390
  %v392 = vsel %vm389, %v391, %v387
  %v393 = vmul.f32 1.0, %v392
  %v394 = vrcp.pop %v224
  %v395 = vmul.f32 %v224, %v394
  %v396 = vsub.f32 1.0, %v395
  %v397 = vmul.f32 %v394, %v396
  %v398 = vadd.f32 %v394, %v397
  %vm399 = vweird.f32 %v224
  %vm400 = vweird.f32 %v394
  %vm401 = vmor %vm399, %vm400
  %v402 = vsel %vm401, %v394, %v398
  %v403 = vand.u32 2147483647, %v224
  %vm404 = vcmp.eq.f32.partialorder %v403, 8.507059e+37
  %v405 = vand.u32 %v224, 2147483648
  %v406 = vor.u32 1.1754944e-38, %v405
  %v407 = vsel %vm404, %v406, %v402
  %v408 = vmul.f32 1.0, %v407
  %v409 = vrcp.pop %v225
  %v410 = vmul.f32 %v225, %v409
  %v411 = vsub.f32 1.0, %v410
  %v412 = vmul.f32 %v409, %v411
  %v413 = vadd.f32 %v409, %v412
  %vm414 = vweird.f32 %v225
  %vm415 = vweird.f32 %v409
  %vm416 = vmor %vm414, %vm415
  %v417 = vsel %vm416, %v409, %v413
  %v418 = vand.u32 2147483647, %v225
  %vm419 = vcmp.eq.f32.partialorder %v418, 8.507059e+37
  %v420 = vand.u32 %v225, 2147483648
  %v421 = vor.u32 1.1754944e-38, %v420
  %v422 = vsel %vm419, %v421, %v417
  %v423 = vmul.f32 1.0, %v422
  %v424 = vrcp.pop %v226
  %v425 = vmul.f32 %v226, %v424
  %v426 = vsub.f32 1.0, %v425
  %v427 = vmul.f32 %v424, %v426
  %v428 = vadd.f32 %v424, %v427
  %vm429 = vweird.f32 %v226
  %vm430 = vweird.f32 %v424
  %vm431 = vmor %vm429, %vm430
  %v432 = vsel %vm431, %v424, %v428
  %v433 = vand.u32 2147483647, %v226
  %vm434 = vcmp.eq.f32.partialorder %v433, 8.507059e+37
  %v435 = vand.u32 %v226, 2147483648
  %v436 = vor.u32 1.1754944e-38, %v435
  %v437 = vsel %vm434, %v436, %v432
  %v438 = vmul.f32 1.0, %v437
  %v439 = vrcp.pop %v227
  %v440 = vmul.f32 %v227, %v439
  %v441 = vsub.f32 1.0, %v440
  %v442 = vmul.f32 %v439, %v441
  %v443 = vadd.f32 %v439, %v442
  %vm444 = vweird.f32 %v227
  %vm445 = vweird.f32 %v439
  %vm446 = vmor %vm444, %vm445
  %v447 = vsel %vm446, %v439, %v443
  %v448 = vand.u32 2147483647, %v227
  %vm449 = vcmp.eq.f32.partialorder %v448, 8.507059e+37
  %v450 = vand.u32 %v227, 2147483648
  %v451 = vor.u32 1.1754944e-38, %v450
  %v452 = vsel %vm449, %v451, %v447
  %v453 = vmul.f32 1.0, %v452
  %v454 = vrcp.pop %v228
  %v455 = vmul.f32 %v228, %v454
  %v456 = vsub.f32 1.0, %v455
  %v457 = vmul.f32 %v454, %v456
  %v458 = vadd.f32 %v454, %v457
  %vm459 = vweird.f32 %v228
  %vm460 = vweird.f32 %v454
  %vm461 = vmor %vm459, %vm460
  %v462 = vsel %vm461, %v454, %v458
  %v463 = vand.u32 2147483647, %v228
  %vm464 = vcmp.eq.f32.partialorder %v463, 8.507059e+37
  %v465 = vand.u32 %v228, 2147483648
  %v466 = vor.u32 1.1754944e-38, %v465
  %v467 = vsel %vm464, %v466, %v462
  %v468 = vmul.f32 1.0, %v467
  %v469 = vmul.f32 %v126, %v243
  %v470 = vmul.f32 %v128, %v258
  %v471 = vmul.f32 %v131, %v273
  %v472 = vmul.f32 %v133, %v288
  %v473 = vmul.f32 %v136, %v303
  %v474 = vmul.f32 %v138, %v318
  %v475 = vmul.f32 %v141, %v333
  %v476 = vmul.f32 %v143, %v348
  %v477 = vmul.f32 %v146, %v363
  %v478 = vmul.f32 %v148, %v378
  %v479 = vmul.f32 %v151, %v393
  %v480 = vmul.f32 %v153, %v408
  %v481 = vmul.f32 %v156, %v423
  %v482 = vmul.f32 %v158, %v438
  %v483 = vmul.f32 %v161, %v453
  %v484 = vmul.f32 %v163, %v468
  %v485 = vpack.c.bf16 %v469, %v469
  %v486 = vpack.c.bf16 %v470, %v470
  %v487 = vpack.c.bf16 %v471, %v471
  %v488 = vpack.c.bf16 %v472, %v472
  %v489 = vpack.c.bf16 %v473, %v473
  %v490 = vpack.c.bf16 %v474, %v474
  %v491 = vpack.c.bf16 %v475, %v475
  %v492 = vpack.c.bf16 %v476, %v476
  %v493 = vpack.c.bf16 %v477, %v477
  %v494 = vpack.c.bf16 %v478, %v478
  %v495 = vpack.c.bf16 %v479, %v479
  %v496 = vpack.c.bf16 %v480, %v480
  %v497 = vpack.c.bf16 %v481, %v481
  %v498 = vpack.c.bf16 %v482, %v482
  %v499 = vpack.c.bf16 %v483, %v483
  %v500 = vpack.c.bf16 %v484, %v484
  %vm501 = vcmask 257024
  %502 = vst.msk [vmem:[%s3] sm:$0xf] %vm501, %v485
  %503 = vst.msk [vmem:[%s3 + $0x4] sm:$0xf] %vm501, %v486
  %504 = vst.msk [vmem:[%s3 + $0x8] sm:$0xf] %vm501, %v487
  %505 = vst.msk [vmem:[%s3 + $0xc] sm:$0xf] %vm501, %v488
  %506 = vst.msk [vmem:[%s3 + $0x10] sm:$0xf] %vm501, %v489
  %507 = vst.msk [vmem:[%s3 + $0x14] sm:$0xf] %vm501, %v490
  %508 = vst.msk [vmem:[%s3 + $0x18] sm:$0xf] %vm501, %v491
  %509 = vst.msk [vmem:[%s3 + $0x1c] sm:$0xf] %vm501, %v492
  %510 = vst.msk [vmem:[%s3 + $0x20] sm:$0xf] %vm501, %v493
  %511 = vst.msk [vmem:[%s3 + $0x24] sm:$0xf] %vm501, %v494
  %512 = vst.msk [vmem:[%s3 + $0x28] sm:$0xf] %vm501, %v495
  %513 = vst.msk [vmem:[%s3 + $0x2c] sm:$0xf] %vm501, %v496
  %514 = vst.msk [vmem:[%s3 + $0x30] sm:$0xf] %vm501, %v497
  %515 = vst.msk [vmem:[%s3 + $0x34] sm:$0xf] %vm501, %v498
  %516 = vst.msk [vmem:[%s3 + $0x38] sm:$0xf] %vm501, %v499
  %517 = vst.msk [vmem:[%s3 + $0x3c] sm:$0xf] %vm501, %v500
  // Predicated region
  $region14: #{tpu_custom_call.1} parent=0 // pred_check
    _
  $region15: #{tpu_custom_call.1} parent=0 // pred_check_branch
    %519 = sbr.rel (0) target = $region17
  $region16: #{tpu_custom_call.1} parent=0 // pred_region
    _
  $region17: #{tpu_custom_call.1} parent=0 // pred_fallthru
    _
  // Predicated region
  $region18: #{tpu_custom_call.1} parent=0 // pred_check
    _
  $region19: #{tpu_custom_call.1} parent=0 // pred_check_branch
    %521 = sbr.rel (0) target = $region21
  $region20: #{tpu_custom_call.1} parent=0 // pred_region
    _
  $region21: #{tpu_custom_call.1} parent=0 // pred_fallthru
    _

</llo_original>
